<compile_context>
chip_gen: v5e
topology: v5e:2x2
jax: 0.10.0
libtpu: 0.0.40
codegen_flags: <defaults>
</compile_context>

<pallas_src>
import functools
import inspect
import math

import jax
import jax.numpy as jnp
from jax.experimental import pallas as pl
from jax.experimental.pallas import tpu as pltpu

BN_EPS = 1e-5
LANE = 128
SUBLANE = 8
MAX_TM = 2048                 # upper bound on the spatial (lane-axis) tile
STEP_OVERHEAD_LANES = 256     # ~0.35 us per grid step, expressed in "lanes"

try:
    _HAS_PIPELINE_MODE = (
        hasattr(pl, "Buffered")
        and "pipeline_mode" in inspect.signature(pl.BlockSpec).parameters)
except (TypeError, ValueError):
    _HAS_PIPELINE_MODE = False


# ----------------------------- Pallas kernels ------------------------------ #

def _plain_kernel(x_ref, w1_ref, t1_ref, w2_ref, t2_ref, o_ref):
    # x_ref: (1, Cin, TM) -- channels on sublanes, flat spatial on lanes.
    x = x_ref[0]
    h = jnp.dot(w1_ref[...], x, preferred_element_type=jnp.float32) + t1_ref[...]
    h = jnp.maximum(h, 0.0)
    h2 = jnp.dot(w2_ref[...], h.astype(w2_ref.dtype),
                 preferred_element_type=jnp.float32) + t2_ref[...]
    # NOTE: with use_bf16 the identity shortcut is carried in bf16 (documented
    # precision trade-off vs. an f32 residual).
    o_ref[0] = jnp.maximum(h2 + x.astype(jnp.float32), 0.0).astype(o_ref.dtype)


def _down_fold_kernel(x_ref, sel_ref, wcat_ref, tcat_ref, w2_ref, t2_ref, o_ref,
                      *, split):
    # x_ref: (1, Cin, TMF) full-resolution tile covering whole row-pairs.
    # sel_ref: (TMF, TMF//4) 0/1 matrix selecting the even-row/even-col pixels:
    # the stride-2 subsample is done on-chip (one extra MXU pass) so the
    # wrapper never materializes x[:, :, ::2, ::2] in HBM.
    x = x_ref[0]
    xs = jnp.dot(x, sel_ref[...], preferred_element_type=jnp.float32)
    xs = xs.astype(wcat_ref.dtype)
    z = jnp.dot(wcat_ref[...], xs, preferred_element_type=jnp.float32) + tcat_ref[...]
    h = jnp.maximum(z[:split], 0.0)        # conv1 -> bn1 -> relu   (rows 0:split)
    ident = z[split:]                      # conv_d -> bn_d         (rows split:)
    h2 = jnp.dot(w2_ref[...], h.astype(w2_ref.dtype),
                 preferred_element_type=jnp.float32) + t2_ref[...]
    o_ref[0] = jnp.maximum(h2 + ident, 0.0).astype(o_ref.dtype)


def _down_presliced_kernel(x_ref, wcat_ref, tcat_ref, w2_ref, t2_ref, o_ref,
                           *, split):
    # Fallback: input was already spatially subsampled in the wrapper.
    x = x_ref[0]
    z = jnp.dot(wcat_ref[...], x, preferred_element_type=jnp.float32) + tcat_ref[...]
    h = jnp.maximum(z[:split], 0.0)
    ident = z[split:]
    h2 = jnp.dot(w2_ref[...], h.astype(w2_ref.dtype),
                 preferred_element_type=jnp.float32) + t2_ref[...]
    o_ref[0] = jnp.maximum(h2 + ident, 0.0).astype(o_ref.dtype)


# ------------------------------ Param helpers ------------------------------ #

def _init_conv1x1(key, cin, cout):
    kw, kb = jax.random.split(key)
    # PyTorch Conv2d weight (cout, cin, 1, 1) squeezed to (cout, cin).
    w = 0.1 * jax.random.normal(kw, (cout, cin), jnp.float32)
    b = 0.05 * jax.random.normal(kb, (cout,), jnp.float32)
    return w, b


def _init_bn(key, c):
    kg, kb = jax.random.split(key)
    gamma = 1.0 + 0.1 * jax.random.normal(kg, (c,), jnp.float32)
    beta = 0.05 * jax.random.normal(kb, (c,), jnp.float32)
    running_mean = jnp.zeros((c,), jnp.float32)   # fresh-module defaults
    running_var = jnp.ones((c,), jnp.float32)
    return gamma, beta, running_mean, running_var


def _fold_conv_bn(conv, bn):
    """Return (W_folded, shift) so BN(conv(x)) == W_folded @ x + shift."""
    w, b = conv
    gamma, beta, mean, var = bn
    scale = gamma / jnp.sqrt(var + BN_EPS)
    w_folded = w * scale[:, None]                 # fold BN scale into weights
    shift = beta - mean * scale + b * scale
    return w_folded, shift.reshape(-1, 1)


def init_basic_block_params(key, in_channel, out_channel, downsample):
    keys = jax.random.split(key, 6)
    p = {
        "conv1": _init_conv1x1(keys[0], in_channel, out_channel),
        "bn1": _init_bn(keys[1], out_channel),
        "conv2": _init_conv1x1(keys[2], out_channel, out_channel),
        "bn2": _init_bn(keys[3], out_channel),
    }
    if downsample:
        p["conv_d"] = _init_conv1x1(keys[4], in_channel, out_channel)
        p["bn_d"] = _init_bn(keys[5], out_channel)
    return p


# ------------------------------ Tiling helpers ------------------------------ #

def _round_up(x, m):
    return ((x + m - 1) // m) * m


def _vmem_capacity():
    try:
        info = pltpu.get_tpu_info()
        return int(getattr(info, "vmem_capacity_bytes", 64 * 1024 * 1024))
    except Exception:
        return 64 * 1024 * 1024          # conservative (v7x-sized) default


def _vmem_limit(est_bytes, cap):
    want = int(2 * est_bytes) + (8 << 20)
    return int(max(16 << 20, min(want, (cap * 3) // 4)))


def _choose_tm(hw, n, max_tm):
    """Flat-spatial lane tile: multiple of 128 (ragged final block OK) or == hw."""
    if hw <= max_tm:
        if n == 1 and hw >= 2 * LANE:
            # Guarantee >= 2 parallel grid steps so the v7x megacore can split.
            return min(max_tm, _round_up(-(-hw // 2), LANE))
        return hw
    best, best_score = LANE, None
    t = LANE
    while t <= max_tm:
        steps = -(-hw // t)
        # padded lanes actually processed + per-step pipeline overhead
        score = steps * t + steps * STEP_OVERHEAD_LANES
        if best_score is None or score <= best_score:
            best, best_score = t, score
        t += LANE
    return best


def _choose_down_tile(hw, w, cap, itemsize):
    """Full-resolution lane tile (whole row-pairs) for the fused subsample, or
    None if the on-chip selection matrix would not fit comfortably in VMEM."""
    sel_cap = min(16 << 20, cap // 6)
    step = math.lcm(2 * w, 4 * LANE)      # tile and tile//4 stay lane-aligned
    for t in range(step, hw, step):
        if hw % t == 0 and t * (t // 4) * itemsize <= sel_cap:
            return t
    if hw * (hw // 4) * itemsize <= sel_cap:
        return hw                          # whole image per grid step
    return None


def _subsample_matrix(tile_full, w):
    """0/1 matrix S (tile_full, tile_full//4): (X_flat @ S)[c, q] == X[c, 2ro, 2co]."""
    wsub = w // 2
    tile_sub = tile_full // 4
    p = jnp.arange(tile_full)
    r, c = p // w, p % w
    q = jnp.arange(tile_sub)
    ro, co = q // wsub, q % wsub
    return ((r[:, None] == 2 * ro[None, :]) &
            (c[:, None] == 2 * co[None, :])).astype(jnp.float32)


# -------------------------------- Wrapper ----------------------------------- #

def _run_flat(kernel, x_rows, wa, ta, wb, tb, cout, compute_dtype, out_dtype, cap):
    """Run a flat-layout (N, C, HW) kernel with waste/VMEM-aware spatial tiling."""
    n, cin, hw = x_rows.shape
    cdt = jnp.dtype(compute_dtype).itemsize
    odt = jnp.dtype(out_dtype).itemsize

    # Generation-aware tile bound: double-buffered I/O tiles + f32 intermediates.
    per_lane = 2 * cin * cdt + 2 * cout * odt + (wa.shape[0] + 3 * cout) * 4
    max_tm = max(LANE, min(MAX_TM, ((cap // 2) // max(per_lane, 1)) // LANE * LANE))
    tm = _choose_tm(hw, n, max_tm)
    steps = -(-hw // tm)      # ragged final block: reads padded, writes clipped

    x_kwargs = {}
    if _HAS_PIPELINE_MODE and steps >= 3:
        # Deeper input pipelining hides DMA latency for small-channel stages.
        x_kwargs["pipeline_mode"] = pl.Buffered(3)
    x_spec = pl.BlockSpec((1, cin, tm), lambda b, j: (b, 0, j), **x_kwargs)
    full = lambda shape: pl.BlockSpec(shape, lambda b, j: (0,) * len(shape))

    est = (3 * cin * tm * cdt + 2 * cout * tm * odt
           + (wa.shape[0] + 3 * cout) * tm * 4
           + 2 * (wa.size + wb.size) * cdt)

    return pl.pallas_call(
        kernel,
        out_shape=jax.ShapeDtypeStruct((n, cout, hw), out_dtype),
        grid_spec=pltpu.PrefetchScalarGridSpec(
            num_scalar_prefetch=0,
            grid=(n, steps),
            in_specs=[x_spec, full(wa.shape), full(ta.shape),
                      full(wb.shape), full(tb.shape)],
            out_specs=pl.BlockSpec((1, cout, tm), lambda b, j: (b, 0, j)),
        ),
        compiler_params=pltpu.CompilerParams(
            dimension_semantics=("parallel", "parallel"),
            vmem_limit_bytes=_vmem_limit(est, cap)),
    )(x_rows.astype(compute_dtype), wa.astype(compute_dtype), ta,
      wb.astype(compute_dtype), tb)


def basic_block_forward(x, params, downsample, use_bf16=False, out_dtype=None):
    """x: NCHW float32.  Returns NCHW in out_dtype (f32, or bf16 when use_bf16)."""
    n, cin, hh, ww = x.shape
    compute_dtype = jnp.bfloat16 if use_bf16 else jnp.float32
    if out_dtype is None:
        out_dtype = jnp.bfloat16 if use_bf16 else jnp.float32
    cap = _vmem_capacity()
    cdt = jnp.dtype(compute_dtype).itemsize

    w1, t1 = _fold_conv_bn(params["conv1"], params["bn1"])
    w2, t2 = _fold_conv_bn(params["conv2"], params["bn2"])
    cout = w1.shape[0]
    hw = hh * ww

    if not downsample:
        assert cin == cout, "identity path requires in_channel == out_channel"
        out = _run_flat(_plain_kernel, x.reshape(n, cin, hw),
                        w1, t1, w2, t2, cout, compute_dtype, out_dtype, cap)
        return out.reshape(n, cout, hh, ww)

    # ---- downsample variant: conv1 and the shortcut conv share one MXU push ----
    assert hh % 2 == 0 and ww % 2 == 0
    ho2, wo2 = hh // 2, ww // 2
    hw_out = ho2 * wo2

    wd, td = _fold_conv_bn(params["conv_d"], params["bn_d"])
    # Sublane-align the conv1/identity split so z[:split]/z[split:] need no relayout.
    split = _round_up(cout, SUBLANE)
    if split != cout:
        w1 = jnp.pad(w1, ((0, split - cout), (0, 0)))
        t1 = jnp.pad(t1, ((0, split - cout), (0, 0)))
        w2 = jnp.pad(w2, ((0, 0), (0, split - cout)))
    w_first = jnp.concatenate([w1, wd], axis=0)      # (split + Cout, Cin)
    t_first = jnp.concatenate([t1, td], axis=0)      # (split + Cout, 1)

    tmf = _choose_down_tile(hw, ww, cap, cdt)
    if tmf is None:
        # TODO(synk): very large spatial downsample stages fall back to a wrapper
        # strided slice (extra HBM pass) to bound the on-chip selection matrix.
        x_sub = x[:, :, ::2, ::2].reshape(n, cin, hw_out)
        kernel = functools.partial(_down_presliced_kernel, split=split)
        out = _run_flat(kernel, x_sub, w_first, t_first, w2, t2, cout,
                        compute_dtype, out_dtype, cap)
        return out.reshape(n, cout, ho2, wo2)

    # Fused path: stride-2 subsample folded into the kernel via a 0/1 matmul.
    tms = tmf // 4
    sel = _subsample_matrix(tmf, ww).astype(compute_dtype)
    x_rows = x.reshape(n, cin, hw).astype(compute_dtype)
    c1 = w_first.shape[0]
    grid = (n, hw // tmf)                             # tmf divides hw exactly

    full = lambda shape: pl.BlockSpec(shape, lambda b, j: (0,) * len(shape))
    odt = jnp.dtype(out_dtype).itemsize
    est = (2 * cin * tmf * cdt + 2 * cout * tms * odt
           + 2 * tmf * tms * cdt
           + (c1 + 2 * split + 2 * cout) * tms * 4
           + 2 * (c1 * cin + cout * split) * cdt)

    out = pl.pallas_call(
        functools.partial(_down_fold_kernel, split=split),
        out_shape=jax.ShapeDtypeStruct((n, cout, hw_out), out_dtype),
        grid_spec=pltpu.PrefetchScalarGridSpec(
            num_scalar_prefetch=0,
            grid=grid,
            in_specs=[pl.BlockSpec((1, cin, tmf), lambda b, j: (b, 0, j)),
                      full((tmf, tms)),
                      full((c1, cin)), full((c1, 1)),
                      full((cout, split)), full((cout, 1))],
            out_specs=pl.BlockSpec((1, cout, tms), lambda b, j: (b, 0, j)),
        ),
        compiler_params=pltpu.CompilerParams(
            dimension_semantics=("parallel", "parallel"),
            vmem_limit_bytes=_vmem_limit(est, cap)),
    )(x_rows, sel, w_first.astype(compute_dtype), t_first,
      w2.astype(compute_dtype), t2)
    return out.reshape(n, cout, ho2, wo2)


# --------------------------- Pure-JAX reference ----------------------------- #

def _ref_forward(x, params, downsample):
    def conv_bn(xc, conv, bn):
        w, t = _fold_conv_bn(conv, bn)
        return jnp.einsum("oc,nchw->nohw", w, xc) + t.reshape(1, -1, 1, 1)

    x_sub = x[:, :, ::2, ::2] if downsample else x
    h1 = jnp.maximum(conv_bn(x_sub, params["conv1"], params["bn1"]), 0.0)
    h2 = conv_bn(h1, params["conv2"], params["bn2"])
    ident = (conv_bn(x_sub, params["conv_d"], params["bn_d"])
             if downsample else x_sub)
    return jnp.maximum(h2 + ident, 0.0)


# ---------------------------------- Main ------------------------------------ #

if __name__ == "__main__":
    key = jax.random.PRNGKey(0)
    kx, kp1, kp2 = jax.random.split(key, 3)

    x = jax.random.normal(kx, (2, 4, 16, 16), jnp.float32)

    # Downsample variant: in=4, out=8, stride=2 (stride-2 subsample fused on-chip).
    params_down = init_basic_block_params(kp1, 4, 8, downsample=True)
    out_down = basic_block_forward(x, params_down, downsample=True)
    jax.block_until_ready(out_down)
    ref_down = _ref_forward(x, params_down, downsample=True)
    assert out_down.shape == (2, 8, 8, 8)
    assert jnp.allclose(out_down, ref_down, atol=1e-5, rtol=1e-5)

    # Plain variant: in=out=4, stride=1, identity shortcut.
    params_plain = init_basic_block_params(kp2, 4, 4, downsample=False)
    out_plain = basic_block_forward(x, params_plain, downsample=False)
    jax.block_until_ready(out_plain)
    ref_plain = _ref_forward(x, params_plain, downsample=False)
    assert out_plain.shape == (2, 4, 16, 16)
    assert jnp.allclose(out_plain, ref_plain, atol=1e-5, rtol=1e-5)

    # bf16 compute + bf16 output (halved writeback) — looser tolerance.
    out_bf16_d = basic_block_forward(x, params_down, downsample=True, use_bf16=True)
    jax.block_until_ready(out_bf16_d)
    assert out_bf16_d.dtype == jnp.bfloat16
    assert jnp.allclose(out_bf16_d.astype(jnp.float32), ref_down,
                        atol=5e-2, rtol=5e-2)

    out_bf16_p = basic_block_forward(x, params_plain, downsample=False, use_bf16=True)
    jax.block_until_ready(out_bf16_p)
    assert jnp.allclose(out_bf16_p.astype(jnp.float32), ref_plain,
                        atol=5e-2, rtol=5e-2)

    print("KERNEL_OK")
</pallas_src>

<mosaic_0001>
module attributes {stable_mosaic.version = 11 : i64} {
  func.func @_down_fold_kernel(%arg0: i32, %arg1: i32, %arg2: memref<1x4x256xf32, #tpu.memory_space<vmem>>, %arg3: memref<256x64xf32, #tpu.memory_space<vmem>>, %arg4: memref<16x4xf32, #tpu.memory_space<vmem>>, %arg5: memref<16x1xf32, #tpu.memory_space<vmem>>, %arg6: memref<8x8xf32, #tpu.memory_space<vmem>>, %arg7: memref<8x1xf32, #tpu.memory_space<vmem>>, %arg8: memref<1x8x64xf32, #tpu.memory_space<vmem>>) attributes {dimension_semantics = [#tpu.dimension_semantics<parallel>, #tpu.dimension_semantics<parallel>], iteration_bounds = array<i64: 2, 1>, scalar_prefetch = 0 : i64, scratch_operands = 0 : i64, tpu.core_type = #tpu.core_type<tc>, window_params = [{transform_indices = @transform_0, window_bounds = array<i64: 1, 4, 256>}, {pipeline_mode = #tpu.pipeline_mode<synchronous>, transform_indices = @transform_1, window_bounds = array<i64: 256, 64>}, {pipeline_mode = #tpu.pipeline_mode<synchronous>, transform_indices = @transform_2, window_bounds = array<i64: 16, 4>}, {pipeline_mode = #tpu.pipeline_mode<synchronous>, transform_indices = @transform_3, window_bounds = array<i64: 16, 1>}, {pipeline_mode = #tpu.pipeline_mode<synchronous>, transform_indices = @transform_4, window_bounds = array<i64: 8, 8>}, {pipeline_mode = #tpu.pipeline_mode<synchronous>, transform_indices = @transform_5, window_bounds = array<i64: 8, 1>}, {transform_indices = @transform_6, window_bounds = array<i64: 1, 8, 64>}]} {
    %c0 = arith.constant 0 : index
    %c0_0 = arith.constant 0 : index
    %c0_1 = arith.constant 0 : index
    %0 = vector.load %arg2[%c0, %c0_0, %c0_1] : memref<1x4x256xf32, #tpu.memory_space<vmem>>, vector<1x4x256xf32>
    %1 = vector.shape_cast %0 : vector<1x4x256xf32> to vector<4x256xf32>
    %c0_2 = arith.constant 0 : index
    %c0_3 = arith.constant 0 : index
    %2 = vector.load %arg3[%c0_2, %c0_3] : memref<256x64xf32, #tpu.memory_space<vmem>>, vector<256x64xf32>
    %cst = arith.constant dense<0.000000e+00> : vector<4x64xf32>
    %3 = tpu.matmul %1, %2, %cst {dimension_numbers = #tpu.dot_dimension_numbers<[1], [0], [0], [1], [0, 0, 1, 1], [], []>} : vector<4x256xf32>, vector<256x64xf32>, vector<4x64xf32> -> vector<4x64xf32>
    %c0_4 = arith.constant 0 : index
    %c0_5 = arith.constant 0 : index
    %4 = vector.load %arg4[%c0_4, %c0_5] : memref<16x4xf32, #tpu.memory_space<vmem>>, vector<16x4xf32>
    %cst_6 = arith.constant dense<0.000000e+00> : vector<16x64xf32>
    %5 = tpu.matmul %4, %3, %cst_6 {dimension_numbers = #tpu.dot_dimension_numbers<[1], [0], [0], [1], [0, 0, 1, 1], [], []>} : vector<16x4xf32>, vector<4x64xf32>, vector<16x64xf32> -> vector<16x64xf32>
    %c0_7 = arith.constant 0 : index
    %c0_8 = arith.constant 0 : index
    %6 = vector.load %arg5[%c0_7, %c0_8] : memref<16x1xf32, #tpu.memory_space<vmem>>, vector<16x1xf32>
    %7 = vector.broadcast %6 : vector<16x1xf32> to vector<16x64xf32>
    %8 = arith.addf %5, %7 : vector<16x64xf32>
    %9 = vector.extract_strided_slice %8 {offsets = [0, 0], sizes = [8, 64], strides = [1, 1]} : vector<16x64xf32> to vector<8x64xf32>
    %cst_9 = arith.constant 0.000000e+00 : f32
    %10 = vector.broadcast %cst_9 : f32 to vector<8x64xf32>
    %11 = arith.maximumf %9, %10 : vector<8x64xf32>
    %12 = vector.extract_strided_slice %8 {offsets = [8, 0], sizes = [8, 64], strides = [1, 1]} : vector<16x64xf32> to vector<8x64xf32>
    %c0_10 = arith.constant 0 : index
    %c0_11 = arith.constant 0 : index
    %13 = vector.load %arg6[%c0_10, %c0_11] : memref<8x8xf32, #tpu.memory_space<vmem>>, vector<8x8xf32>
    %cst_12 = arith.constant dense<0.000000e+00> : vector<8x64xf32>
    %14 = tpu.matmul %13, %11, %cst_12 {dimension_numbers = #tpu.dot_dimension_numbers<[1], [0], [0], [1], [0, 0, 1, 1], [], []>} : vector<8x8xf32>, vector<8x64xf32>, vector<8x64xf32> -> vector<8x64xf32>
    %c0_13 = arith.constant 0 : index
    %c0_14 = arith.constant 0 : index
    %15 = vector.load %arg7[%c0_13, %c0_14] : memref<8x1xf32, #tpu.memory_space<vmem>>, vector<8x1xf32>
    %16 = vector.broadcast %15 : vector<8x1xf32> to vector<8x64xf32>
    %17 = arith.addf %14, %16 : vector<8x64xf32>
    %18 = arith.addf %17, %12 : vector<8x64xf32>
    %cst_15 = arith.constant 0.000000e+00 : f32
    %19 = vector.broadcast %cst_15 : f32 to vector<8x64xf32>
    %20 = arith.maximumf %18, %19 : vector<8x64xf32>
    %c0_16 = arith.constant 0 : index
    %c0_17 = arith.constant 0 : index
    %c0_18 = arith.constant 0 : index
    %21 = vector.load %arg8[%c0_16, %c0_17, %c0_18] : memref<1x8x64xf32, #tpu.memory_space<vmem>>, vector<1x8x64xf32>
    %22 = vector.shape_cast %21 : vector<1x8x64xf32> to vector<8x64xf32>
    %23 = vector.shape_cast %20 : vector<8x64xf32> to vector<1x8x64xf32>
    tpu.vector_store %arg8[%c0_16, %c0_17, %c0_18], %23 {strides = array<i32>} : memref<1x8x64xf32, #tpu.memory_space<vmem>>, vector<1x8x64xf32>,
    return
  }
  func.func @transform_0(%arg0: i32, %arg1: i32) -> (i32, i32, i32) {
    %c0_i32 = arith.constant 0 : i32
    %c0_i32_0 = arith.constant 0 : i32
    return %arg0, %c0_i32, %arg1 : i32, i32, i32
  }
  func.func @transform_1(%arg0: i32, %arg1: i32) -> (i32, i32) {
    %c0_i32 = arith.constant 0 : i32
    %c0_i32_0 = arith.constant 0 : i32
    %c0_i32_1 = arith.constant 0 : i32
    return %c0_i32, %c0_i32_0 : i32, i32
  }
  func.func @transform_2(%arg0: i32, %arg1: i32) -> (i32, i32) {
    %c0_i32 = arith.constant 0 : i32
    %c0_i32_0 = arith.constant 0 : i32
    %c0_i32_1 = arith.constant 0 : i32
    return %c0_i32, %c0_i32_0 : i32, i32
  }
  func.func @transform_3(%arg0: i32, %arg1: i32) -> (i32, i32) {
    %c0_i32 = arith.constant 0 : i32
    %c0_i32_0 = arith.constant 0 : i32
    %c0_i32_1 = arith.constant 0 : i32
    return %c0_i32, %c0_i32_0 : i32, i32
  }
  func.func @transform_4(%arg0: i32, %arg1: i32) -> (i32, i32) {
    %c0_i32 = arith.constant 0 : i32
    %c0_i32_0 = arith.constant 0 : i32
    %c0_i32_1 = arith.constant 0 : i32
    return %c0_i32, %c0_i32_0 : i32, i32
  }
  func.func @transform_5(%arg0: i32, %arg1: i32) -> (i32, i32) {
    %c0_i32 = arith.constant 0 : i32
    %c0_i32_0 = arith.constant 0 : i32
    %c0_i32_1 = arith.constant 0 : i32
    return %c0_i32, %c0_i32_0 : i32, i32
  }
  func.func @transform_6(%arg0: i32, %arg1: i32) -> (i32, i32, i32) {
    %c0_i32 = arith.constant 0 : i32
    %c0_i32_0 = arith.constant 0 : i32
    return %arg0, %c0_i32, %arg1 : i32, i32, i32
  }
}

</mosaic_0001>

<llo_original>
// kernel: tpu_custom_call.1
$region0: #{tpu_custom_call.1}
  #allocation0 [shape = 'u32[]', space=smem, size = 0x4, offset = 0x4, fixed_abs, tag = 'smem constant byte address 0x4 - core index']
  #allocation1 [shape = 'u32[72,128]{1,0:T(1,128)}', space=vmem, size = 0x9000, scoped, tag = 'internal scratch']
  %s0 = inlined_call_operand.vmem [shape: f32[2,4,256], index: 0, kind: input, shape index: {}]
  %s1 = inlined_call_operand.vmem [shape: f32[256,64], index: 1, kind: input, shape index: {}]
  %s2 = inlined_call_operand.vmem [shape: f32[16,4], index: 2, kind: input, shape index: {}]
  %s3 = inlined_call_operand.vmem [shape: f32[16,1], index: 3, kind: input, shape index: {}]
  %s4 = inlined_call_operand.vmem [shape: f32[8,8], index: 4, kind: input, shape index: {}]
  %s5 = inlined_call_operand.vmem [shape: f32[8,1], index: 5, kind: input, shape index: {}]
  %s6 = inlined_call_operand.hbm [shape: f32[2,8,64], index: 6, kind: output, shape index: {}]
  %s7 = sld [smem:[#allocation0]]
  $region57: #{tpu_custom_call.1} parent=0
    _
  %s9 = ssub.s32 1, %s7
  %s10 = scalar_select 0, %s9, %s7
  $region1: #{tpu_custom_call.1} parent=0
    #allocation2 [shape = 'u8[8192]{0}', space=vmem, size = 0x2000, scoped, tag = 'output window, operand 0']
    #allocation3 [shape = 's32[2]{0}', space=sflag, size = 0x8, scoped, tag = 'scoped memory for tpu_custom_call.1']
    %11 = vsyncpa [#allocation3], 0
    %s12 = scalar_lea.sflag [#allocation3], 1
    %13 = vsyncpa %s12, 0
    loop: start=0, step=1, limit=4
    $region2: #{tpu_custom_call.1} parent=1 // loop_pre_header
      _
    $region3: #{tpu_custom_call.1} parent=1 // loop_header
      %s15 = sphi 0, %s19
      %p16 = scmp.ge.s32.totalorder %s15, 4
      %s22 = sphi 0, %s34
      %s23 = sphi 0, %s30
      %s24 = sphi 0, %s22
      %s25 = sphi 0, %s23
      %s26 = sphi 0, %s24
      %s27 = sphi 0, %s25
      %s39 = sphi 0, %s41
      %s42 = sphi 0, %s39
      %s43 = sphi 0, %s42
      %s59 = sphi 0, %s43
      %s63 = sphi 0, %s63
      %s65 = sphi 0, %s63
      %s66 = sphi 0, %s65
      %s80 = sphi 0, %s66
      %s84 = sphi 0, %s84
      %s86 = sphi 0, %s84
      %s87 = sphi 0, %s86
      %s101 = sphi 0, %s87
      %s105 = sphi 0, %s105
      %s107 = sphi 0, %s105
      %s108 = sphi 0, %s107
      %s122 = sphi 0, %s108
      %s126 = sphi 0, %s126
      %s128 = sphi 0, %s126
      %s129 = sphi 0, %s128
      %s143 = sphi 0, %s129
      %s147 = sphi 0, %s147
      %s149 = sphi 0, %s147
      %s150 = sphi 0, %s149
      %s164 = sphi 0, %s150
      %s172 = sphi 0, %s174
      %s175 = sphi 0, %s172
      %s176 = sphi 0, %s175
      %s192 = sphi 0, %s176
    $region4: #{tpu_custom_call.1} parent=1 // loop_header_branch
      %18 = sbr.rel (%p16) target = $region8
    $region5: #{tpu_custom_call.1} parent=1 // loop_body
      %s20 = ssub.s32 %s15, 1
      %s21 = ssub.s32 %s15, 2
      %s28 = sadd.s32 1, %s23
      %p29 = scmp.ge.s32.totalorder %s28, 1
      %s30 = scalar_select %p29, 0, %s28
      %s31 = sadd.s32 1, %s22
      %s32 = scalar_select %p29, %s31, %s22
      %p33 = scmp.ge.s32.totalorder %s32, 2
      %s34 = scalar_select %p33, 0, %s32
      %s35 = ssub.s32 %s22, %s34
      %s36 = ssub.s32 %s23, %s30
      %s37 = sor.u32 %s35, %s36
      %p38 = scmp.eq.s32.totalorder %s37, 0
      %s40 = sadd.s32 %s39, 1
      %s41 = scalar_select %p38, %s39, %s40
      %p44 = pneg %p38
      %p45 = scmp.eq.s32.totalorder %s15, 1
      %p46 = por %p44, %p45
      %p47 = scmp.ne.s32.totalorder %s39, %s42
      %p48 = scmp.eq.s32.totalorder %s15, 0
      %p49 = por %p47, %p48
      %p50 = scmp.ne.s32.totalorder %s39, %s42
      %p51 = scmp.eq.s32.totalorder %s20, 1
      %p52 = por %p50, %p51
      %p53 = scmp.ne.s32.totalorder %s42, %s43
      %p54 = scmp.eq.s32.totalorder %s20, 0
      %p55 = por %p53, %p54
      %p56 = scmp.ne.s32.totalorder %s42, %s43
      %p57 = scmp.eq.s32.totalorder %s21, 1
      %p58 = por %p56, %p57
      %p60 = scmp.ne.s32.totalorder %s43, %s59
      %p61 = scmp.eq.s32.totalorder %s21, 0
      %p62 = por %p60, %p61
      %s64 = sadd.s32 %s63, 1
      %p67 = scmp.eq.s32.totalorder %s15, 1
      %p68 = scmp.ne.s32.totalorder %s63, %s65
      %p69 = scmp.eq.s32.totalorder %s15, 0
      %p70 = por %p68, %p69
      %p71 = scmp.ne.s32.totalorder %s63, %s65
      %p72 = scmp.eq.s32.totalorder %s20, 1
      %p73 = por %p71, %p72
      %p74 = scmp.ne.s32.totalorder %s65, %s66
      %p75 = scmp.eq.s32.totalorder %s20, 0
      %p76 = por %p74, %p75
      %p77 = scmp.ne.s32.totalorder %s65, %s66
      %p78 = scmp.eq.s32.totalorder %s21, 1
      %p79 = por %p77, %p78
      %p81 = scmp.ne.s32.totalorder %s66, %s80
      %p82 = scmp.eq.s32.totalorder %s21, 0
      %p83 = por %p81, %p82
      %s85 = sadd.s32 %s84, 1
      %p88 = scmp.eq.s32.totalorder %s15, 1
      %p89 = scmp.ne.s32.totalorder %s84, %s86
      %p90 = scmp.eq.s32.totalorder %s15, 0
      %p91 = por %p89, %p90
      %p92 = scmp.ne.s32.totalorder %s84, %s86
      %p93 = scmp.eq.s32.totalorder %s20, 1
      %p94 = por %p92, %p93
      %p95 = scmp.ne.s32.totalorder %s86, %s87
      %p96 = scmp.eq.s32.totalorder %s20, 0
      %p97 = por %p95, %p96
      %p98 = scmp.ne.s32.totalorder %s86, %s87
      %p99 = scmp.eq.s32.totalorder %s21, 1
      %p100 = por %p98, %p99
      %p102 = scmp.ne.s32.totalorder %s87, %s101
      %p103 = scmp.eq.s32.totalorder %s21, 0
      %p104 = por %p102, %p103
      %s106 = sadd.s32 %s105, 1
      %p109 = scmp.eq.s32.totalorder %s15, 1
      %p110 = scmp.ne.s32.totalorder %s105, %s107
      %p111 = scmp.eq.s32.totalorder %s15, 0
      %p112 = por %p110, %p111
      %p113 = scmp.ne.s32.totalorder %s105, %s107
      %p114 = scmp.eq.s32.totalorder %s20, 1
      %p115 = por %p113, %p114
      %p116 = scmp.ne.s32.totalorder %s107, %s108
      %p117 = scmp.eq.s32.totalorder %s20, 0
      %p118 = por %p116, %p117
      %p119 = scmp.ne.s32.totalorder %s107, %s108
      %p120 = scmp.eq.s32.totalorder %s21, 1
      %p121 = por %p119, %p120
      %p123 = scmp.ne.s32.totalorder %s108, %s122
      %p124 = scmp.eq.s32.totalorder %s21, 0
      %p125 = por %p123, %p124
      %s127 = sadd.s32 %s126, 1
      %p130 = scmp.eq.s32.totalorder %s15, 1
      %p131 = scmp.ne.s32.totalorder %s126, %s128
      %p132 = scmp.eq.s32.totalorder %s15, 0
      %p133 = por %p131, %p132
      %p134 = scmp.ne.s32.totalorder %s126, %s128
      %p135 = scmp.eq.s32.totalorder %s20, 1
      %p136 = por %p134, %p135
      %p137 = scmp.ne.s32.totalorder %s128, %s129
      %p138 = scmp.eq.s32.totalorder %s20, 0
      %p139 = por %p137, %p138
      %p140 = scmp.ne.s32.totalorder %s128, %s129
      %p141 = scmp.eq.s32.totalorder %s21, 1
      %p142 = por %p140, %p141
      %p144 = scmp.ne.s32.totalorder %s129, %s143
      %p145 = scmp.eq.s32.totalorder %s21, 0
      %p146 = por %p144, %p145
      %s148 = sadd.s32 %s147, 1
      %p151 = scmp.eq.s32.totalorder %s15, 1
      %p152 = scmp.ne.s32.totalorder %s147, %s149
      %p153 = scmp.eq.s32.totalorder %s15, 0
      %p154 = por %p152, %p153
      %p155 = scmp.ne.s32.totalorder %s147, %s149
      %p156 = scmp.eq.s32.totalorder %s20, 1
      %p157 = por %p155, %p156
      %p158 = scmp.ne.s32.totalorder %s149, %s150
      %p159 = scmp.eq.s32.totalorder %s20, 0
      %p160 = por %p158, %p159
      %p161 = scmp.ne.s32.totalorder %s149, %s150
      %p162 = scmp.eq.s32.totalorder %s21, 1
      %p163 = por %p161, %p162
      %p165 = scmp.ne.s32.totalorder %s150, %s164
      %p166 = scmp.eq.s32.totalorder %s21, 0
      %p167 = por %p165, %p166
      %s168 = ssub.s32 %s22, %s34
      %s169 = ssub.s32 %s23, %s30
      %s170 = sor.u32 %s168, %s169
      %p171 = scmp.eq.s32.totalorder %s170, 0
      %s173 = sadd.s32 %s172, 1
      %s174 = scalar_select %p171, %s172, %s173
      %p177 = pneg %p171
      %p178 = scmp.eq.s32.totalorder %s15, 1
      %p179 = por %p177, %p178
      %p180 = scmp.ne.s32.totalorder %s172, %s175
      %p181 = scmp.eq.s32.totalorder %s15, 0
      %p182 = por %p180, %p181
      %p183 = scmp.ne.s32.totalorder %s172, %s175
      %p184 = scmp.eq.s32.totalorder %s20, 1
      %p185 = por %p183, %p184
      %p186 = scmp.ne.s32.totalorder %s175, %s176
      %p187 = scmp.eq.s32.totalorder %s20, 0
      %p188 = por %p186, %p187
      %p189 = scmp.ne.s32.totalorder %s175, %s176
      %p190 = scmp.eq.s32.totalorder %s21, 1
      %p191 = por %p189, %p190
      %p193 = scmp.ne.s32.totalorder %s176, %s192
      %p194 = scmp.eq.s32.totalorder %s21, 0
      %p195 = por %p193, %p194
      %p196 = scmp.le.s32.totalorder 1, %s15
      %p197 = scmp.lt.s32.totalorder %s15, 3
      %p198 = pnand %p196, %p197
      %p199 = pneg %p198
      // Predicated region
      $region9: #{tpu_custom_call.1} parent=5 // pred_check
        _
      $region10: #{tpu_custom_call.1} parent=5 // pred_check_branch
        %201 = sbr.rel (%p198) target = $region12
      $region11: #{tpu_custom_call.1} parent=5 // pred_region
        %s202 = ssub.s32 %s15, 1
        // Predicated region
        $region13: #{tpu_custom_call.1} parent=11 // pred_check
          %p203 = pneg %p76
        $region14: #{tpu_custom_call.1} parent=11 // pred_check_branch
          %205 = sbr.rel (%p203) target = $region16
        $region15: #{tpu_custom_call.1} parent=11 // pred_region
          _
        $region16: #{tpu_custom_call.1} parent=11 // pred_fallthru
          _
        // Predicated region
        $region17: #{tpu_custom_call.1} parent=11 // pred_check
          %p206 = pneg %p97
        $region18: #{tpu_custom_call.1} parent=11 // pred_check_branch
          %208 = sbr.rel (%p206) target = $region20
        $region19: #{tpu_custom_call.1} parent=11 // pred_region
          _
        $region20: #{tpu_custom_call.1} parent=11 // pred_fallthru
          _
        // Predicated region
        $region21: #{tpu_custom_call.1} parent=11 // pred_check
          %p209 = pneg %p118
        $region22: #{tpu_custom_call.1} parent=11 // pred_check_branch
          %211 = sbr.rel (%p209) target = $region24
        $region23: #{tpu_custom_call.1} parent=11 // pred_region
          _
        $region24: #{tpu_custom_call.1} parent=11 // pred_fallthru
          _
        // Predicated region
        $region25: #{tpu_custom_call.1} parent=11 // pred_check
          %p212 = pneg %p139
        $region26: #{tpu_custom_call.1} parent=11 // pred_check_branch
          %214 = sbr.rel (%p212) target = $region28
        $region27: #{tpu_custom_call.1} parent=11 // pred_region
          _
        $region28: #{tpu_custom_call.1} parent=11 // pred_fallthru
          _
        // Predicated region
        $region29: #{tpu_custom_call.1} parent=11 // pred_check
          %p215 = pneg %p160
        $region30: #{tpu_custom_call.1} parent=11 // pred_check_branch
          %217 = sbr.rel (%p215) target = $region32
        $region31: #{tpu_custom_call.1} parent=11 // pred_region
          _
        $region32: #{tpu_custom_call.1} parent=11 // pred_fallthru
          _
      $region12: #{tpu_custom_call.1} parent=5 // pred_fallthru
        _
      %p218 = scmp.lt.s32.totalorder %s15, 2
      // Predicated region
      $region33: #{tpu_custom_call.1} parent=5 // pred_check
        %p219 = pneg %p218
      $region34: #{tpu_custom_call.1} parent=5 // pred_check_branch
        %221 = sbr.rel (%p219) target = $region36
      $region35: #{tpu_custom_call.1} parent=5 // pred_region
        // Predicated region
        $region37: #{tpu_custom_call.1} parent=35 // pred_check
          %p222 = pneg %p49
        $region38: #{tpu_custom_call.1} parent=35 // pred_check_branch
          %224 = sbr.rel (%p222) target = $region40
        $region39: #{tpu_custom_call.1} parent=35 // pred_region
          %s225 = smul.u32 2, %s23
          %p226 = scmp.lt.s32.totalorder %s22, 1
          %s227 = scalar_select %p226, %s22, 1
          %p228 = scmp.lt.s32.totalorder %s225, 1
          %s229 = scalar_select %p228, %s225, 1
          %s230 = smul.addr %s227, 2
          %s231 = sadd.s32 %s229, %s230
          %s232 = smul.addr %s231, 4
          %s233 = scalar_lea.vmem %s0, %s232
          %s234 = smul.u32 2, %s23
        $region40: #{tpu_custom_call.1} parent=35 // pred_fallthru
          _
      $region36: #{tpu_custom_call.1} parent=5 // pred_fallthru
        _
      %p235 = scmp.le.s32.totalorder 1, %s15
      %p236 = scmp.lt.s32.totalorder %s15, 3
      %p237 = pnand %p235, %p236
      %p238 = pneg %p237
      // Predicated region
      $region41: #{tpu_custom_call.1} parent=5 // pred_check
        _
      $region42: #{tpu_custom_call.1} parent=5 // pred_check_branch
        %240 = sbr.rel (%p237) target = $region44
      $region43: #{tpu_custom_call.1} parent=5 // pred_region
        %s241 = ssub.s32 %s15, 1
        %s242 = smul.u32 2, %s25
        %p243 = scmp.lt.s32.totalorder %s24, 1
        %s244 = scalar_select %p243, %s24, 1
        %p245 = scmp.lt.s32.totalorder %s242, 1
        %s246 = scalar_select %p245, %s242, 1
        %s247 = smul.addr %s244, 2
        %s248 = sadd.s32 %s246, %s247
        %s249 = smul.addr %s248, 4
        %s250 = scalar_lea.vmem %s0, %s249
        %p251 = pneg %p55
        %p252 = pneg %p52
        %p253 = pneg %p76
        %p254 = pneg %p73
        %p255 = pneg %p97
        %p256 = pneg %p94
        %p257 = pneg %p118
        %p258 = pneg %p115
        %p259 = pneg %p139
        %p260 = pneg %p136
        %p261 = pneg %p160
        %p262 = pneg %p157
        %p263 = pneg %p188
        %p264 = pneg %p185
        %s265 = sand.u32 %s175, 1
        %s266 = scalar_lea.sflag [#allocation3], %s265
        %s267 = sand.u32 %s175, 1
        %s268 = smul.addr %s267, 8
        %s269 = scalar_lea.vmem [#allocation2], %s268
        %s270 = smul.u32 2, %s25
        %p271 = scmp.lt.s32.totalorder %s24, 1
        %s272 = scalar_select %p271, %s24, 1
        %p273 = scmp.lt.s32.totalorder %s270, 1
        %s274 = scalar_select %p273, %s270, 1
        %s275 = smul.addr %s272, 2
        %s276 = sadd.s32 %s274, %s275
        %s277 = smul.addr %s276, 4
        %s278 = scalar_lea.vmem %s0, %s277
        %s279 = smul.u32 2, %s25
        %v280 = vld [vmem:[%s278] sm:$0xff]
        %v281 = vld [vmem:[%s1] sm:$0xff]
        %v282 = vld [vmem:[%s1 + $0x8] sm:$0xff]
        %v283 = vld [vmem:[%s1 + $0x10] sm:$0xff]
        %v284 = vld [vmem:[%s1 + $0x18] sm:$0xff]
        %v285 = vld [vmem:[%s1 + $0x20] sm:$0xff]
        %v286 = vld [vmem:[%s1 + $0x28] sm:$0xff]
        %v287 = vld [vmem:[%s1 + $0x30] sm:$0xff]
        %v288 = vld [vmem:[%s1 + $0x38] sm:$0xff]
        %v289 = vld [vmem:[%s1 + $0x40] sm:$0xff]
        %v290 = vld [vmem:[%s1 + $0x48] sm:$0xff]
        %v291 = vld [vmem:[%s1 + $0x50] sm:$0xff]
        %v292 = vld [vmem:[%s1 + $0x58] sm:$0xff]
        %v293 = vld [vmem:[%s1 + $0x60] sm:$0xff]
        %v294 = vld [vmem:[%s1 + $0x68] sm:$0xff]
        %v295 = vld [vmem:[%s1 + $0x70] sm:$0xff]
        %v296 = vld [vmem:[%s1 + $0x78] sm:$0xff]
        %v297 = vld [vmem:[%s1 + $0x80] sm:$0xff]
        %v298 = vld [vmem:[%s1 + $0x88] sm:$0xff]
        %v299 = vld [vmem:[%s1 + $0x90] sm:$0xff]
        %v300 = vld [vmem:[%s1 + $0x98] sm:$0xff]
        %v301 = vld [vmem:[%s1 + $0xa0] sm:$0xff]
        %v302 = vld [vmem:[%s1 + $0xa8] sm:$0xff]
        %v303 = vld [vmem:[%s1 + $0xb0] sm:$0xff]
        %v304 = vld [vmem:[%s1 + $0xb8] sm:$0xff]
        %v305 = vld [vmem:[%s1 + $0xc0] sm:$0xff]
        %v306 = vld [vmem:[%s1 + $0xc8] sm:$0xff]
        %v307 = vld [vmem:[%s1 + $0xd0] sm:$0xff]
        %v308 = vld [vmem:[%s1 + $0xd8] sm:$0xff]
        %v309 = vld [vmem:[%s1 + $0xe0] sm:$0xff]
        %v310 = vld [vmem:[%s1 + $0xe8] sm:$0xff]
        %v311 = vld [vmem:[%s1 + $0xf0] sm:$0xff]
        %v312 = vld [vmem:[%s1 + $0xf8] sm:$0xff]
        %314 = vst [vmem:[#allocation1] ss:$2 sm:$0xff] %v280
        %v315 = vld.sshfl [vmem:[#allocation1] sm:$0xff pattern:$0x75316420]
        %v316 = vld.sshfl [vmem:[#allocation1 + $0x8] sm:$0xff pattern:$0x75316420]
        %319 = vmatpush.msra.mxu0 %v296
        %320 = vmatpush.msra.mxu0 %v295
        %321 = vmatpush.msra.mxu0 %v294
        %322 = vmatpush.msra.mxu0 %v293
        %323 = vmatpush.msra.mxu0 %v292
        %324 = vmatpush.msra.mxu0 %v291
        %325 = vmatpush.msra.mxu0 %v290
        %326 = vmatpush.msra.mxu0 %v289
        %327 = vmatpush.msra.mxu0 %v288
        %328 = vmatpush.msra.mxu0 %v287
        %329 = vmatpush.msra.mxu0 %v286
        %330 = vmatpush.msra.mxu0 %v285
        %331 = vmatpush.msra.mxu0 %v284
        %332 = vmatpush.msra.mxu0 %v283
        %333 = vmatpush.msra.mxu0 %v282
        %334 = vmatpush.msra.mxu0 %v281
        %335 = vmatmul.f32.gmra.mxu0 %v315
        %v336 = vpop.f32.mrf.mxu0
        %v337 = vadd.f32 0.0, %v336
        %338 = vdwg.mxu0
        %339 = vmatpush.msra.mxu0 %v312
        %340 = vmatpush.msra.mxu0 %v311
        %341 = vmatpush.msra.mxu0 %v310
        %342 = vmatpush.msra.mxu0 %v309
        %343 = vmatpush.msra.mxu0 %v308
        %344 = vmatpush.msra.mxu0 %v307
        %345 = vmatpush.msra.mxu0 %v306
        %346 = vmatpush.msra.mxu0 %v305
        %347 = vmatpush.msra.mxu0 %v304
        %348 = vmatpush.msra.mxu0 %v303
        %349 = vmatpush.msra.mxu0 %v302
        %350 = vmatpush.msra.mxu0 %v301
        %351 = vmatpush.msra.mxu0 %v300
        %352 = vmatpush.msra.mxu0 %v299
        %353 = vmatpush.msra.mxu0 %v298
        %354 = vmatpush.msra.mxu0 %v297
        %355 = vmatmul.f32.gmra.mxu0 %v316
        %v356 = vpop.f32.mrf.mxu0
        %v357 = vadd.f32 %v337, %v356
        %358 = vdwg.mxu0
        %v359 = vld [vmem:[%s2] sm:$0xff]
        %v360 = vld [vmem:[%s2 + $0x8] sm:$0xff]
        %v361 = vld [vmem:[%s3] sm:$0xff]
        %v362 = vld [vmem:[%s3 + $0x8] sm:$0xff]
        %364 = vset.pattern.permute.xlu0 0
        %365 = vperm.xlu0 %364, %v361
        %v366 = vpop.permute.xlu0 %365
        %369 = vset.pattern.permute.xlu0 0
        %370 = vperm.xlu0 %369, %v362
        %v371 = vpop.permute.xlu0 %370
        %vm373 = vcmask 31744
        %v375 = vsel %vm373, %v359, 0
        %v378 = vsel %vm373, %v360, 0
        %vm380 = vcmask 1043456
        %v382 = vsel %vm380, %v357, 0
        %384 = vmatpush.msra.mxu0 0.0
        %385 = vmatpush.msra.mxu0 0.0
        %386 = vmatpush.msra.mxu0 0.0
        %387 = vmatpush.msra.mxu0 0.0
        %388 = vmatpush.msra.mxu0 0.0
        %389 = vmatpush.msra.mxu0 0.0
        %390 = vmatpush.msra.mxu0 0.0
        %391 = vmatpush.msra.mxu0 0.0
        %392 = vmatpush.msra.mxu0 0.0
        %393 = vmatpush.msra.mxu0 0.0
        %394 = vmatpush.msra.mxu0 0.0
        %395 = vmatpush.msra.mxu0 0.0
        %396 = vmatpush.msra.mxu0 0.0
        %397 = vmatpush.msra.mxu0 0.0
        %398 = vmatpush.msra.mxu0 0.0
        %399 = vmatpush.msra.mxu0 %v382
        %400 = vmatmul.f32.gmra.mxu0 %v375
        %v401 = vpop.f32.mrf.mxu0
        %v402 = vadd.f32 %v366, %v401
        %403 = vmatmul.f32.gmra.mxu0 %v378
        %v404 = vpop.f32.mrf.mxu0
        %v405 = vadd.f32 %v371, %v404
        %406 = vdwg.mxu0
        %v407 = vmax.f32 %v402, 0.0
        %v408 = vld [vmem:[%s4] sm:$0xff]
        %v409 = vld [vmem:[%s5] sm:$0xff]
        %411 = vset.pattern.permute.xlu0 0
        %412 = vperm.xlu0 %411, %v409
        %v413 = vpop.permute.xlu0 %412
        %vm415 = vcmask 64512
        %v417 = vsel %vm415, %v408, 0
        %419 = vmatpush.msra.mxu0 0.0
        %420 = vmatpush.msra.mxu0 0.0
        %421 = vmatpush.msra.mxu0 0.0
        %422 = vmatpush.msra.mxu0 0.0
        %423 = vmatpush.msra.mxu0 0.0
        %424 = vmatpush.msra.mxu0 0.0
        %425 = vmatpush.msra.mxu0 0.0
        %426 = vmatpush.msra.mxu0 0.0
        %427 = vmatpush.msra.mxu0 0.0
        %428 = vmatpush.msra.mxu0 0.0
        %429 = vmatpush.msra.mxu0 0.0
        %430 = vmatpush.msra.mxu0 0.0
        %431 = vmatpush.msra.mxu0 0.0
        %432 = vmatpush.msra.mxu0 0.0
        %433 = vmatpush.msra.mxu0 0.0
        %434 = vmatpush.msra.mxu0 %v407
        %435 = vmatmul.f32.gmra.mxu0 %v417
        %v436 = vpop.f32.mrf.mxu0
        %v437 = vadd.f32 %v413, %v436
        %438 = vdwg.mxu0
        %v439 = vadd.f32 %v437, %v405
        %v440 = vmax.f32 %v439, 0.0
        %vm441 = vcmask 523264
        %442 = vst.msk [vmem:[%s269] sm:$0xff] %vm441, %v440
        %s443 = sand.u32 %s175, 1
        %s444 = scalar_lea.sflag [#allocation3], %s443
        %s445 = sand.u32 %s175, 1
        %s446 = smul.addr %s445, 8
        %s447 = scalar_lea.vmem [#allocation2], %s446
        // Predicated region
        $region45: #{tpu_custom_call.1} parent=43 // pred_check
          %p448 = pneg %p185
        $region46: #{tpu_custom_call.1} parent=43 // pred_check_branch
          %450 = sbr.rel (%p448) target = $region48
        $region47: #{tpu_custom_call.1} parent=43 // pred_region
          %452 = vsyncadd %s444, 0
          %s453 = sadd.s32 %s25, %s24
          %s454 = smul.addr %s453, 8
          %s455 = scalar_lea.hbm %s6, %s454
          %s457 = sshll.u32 %s447, 4
          %s458 = int_to_ptr.vmem [resolvable:$true] %s457
          %s459 = sshll.u32 %s455, 4
          %s460 = int_to_ptr.hbm [resolvable:$true] %s459
          %462 = dma.vmem_to_hbm [thread:$0]  %s458, 128, %s460, %s444
        $region48: #{tpu_custom_call.1} parent=43 // pred_fallthru
          _
      $region44: #{tpu_custom_call.1} parent=5 // pred_fallthru
        _
      %p463 = scmp.le.s32.totalorder 2, %s15
      // Predicated region
      $region49: #{tpu_custom_call.1} parent=5 // pred_check
        %p464 = pneg %p463
      $region50: #{tpu_custom_call.1} parent=5 // pred_check_branch
        %466 = sbr.rel (%p464) target = $region52
      $region51: #{tpu_custom_call.1} parent=5 // pred_region
        %s467 = ssub.s32 %s15, 2
        // Predicated region
        $region53: #{tpu_custom_call.1} parent=51 // pred_check
          %p468 = pneg %p191
        $region54: #{tpu_custom_call.1} parent=51 // pred_check_branch
          %470 = sbr.rel (%p468) target = $region56
        $region55: #{tpu_custom_call.1} parent=51 // pred_region
          %s471 = sand.u32 %s176, 1
          %s472 = scalar_lea.sflag [#allocation3], %s471
          %s473 = sand.u32 %s176, 1
          %s474 = smul.addr %s473, 8
          %s475 = scalar_lea.vmem [#allocation2], %s474
          %477 = dma.done %s472, 128
        $region56: #{tpu_custom_call.1} parent=51 // pred_fallthru
          _
      $region52: #{tpu_custom_call.1} parent=5 // pred_fallthru
        _
    $region6: #{tpu_custom_call.1} parent=1 // loop_footer
      %s19 = sadd.s32 1, %s15
    $region7: #{tpu_custom_call.1} parent=1 // loop_footer_branch
      %14 = sbr.rel target = $region3
    $region8: #{tpu_custom_call.1} parent=1 // loop_exit
      _
    %478 = vsyncpa [#allocation3], 1
    %s479 = scalar_lea.sflag [#allocation3], 1
    %480 = vsyncpa %s479, 1

</llo_original>
